<compile_context>
chip_gen: v7x
topology: tpu7x:2x2x1
jax: 0.10.0
libtpu: 0.0.40
codegen_flags: <defaults>
</compile_context>

<pallas_src>
import jax
import jax.numpy as jnp
from jax.experimental import pallas as pl
from jax.experimental.pallas import tpu as pltpu

_LANE_CANDIDATES = (1024, 512, 256, 128)   # lane-dense widths (multiples of 128)
_TARGET_BLOCK_BYTES = 4 * 1024 * 1024      # ~4 MiB/block; <1-2% gain beyond this
_VMEM_LIMIT_BYTES = 32 * 1024 * 1024       # ok on v5e/v6e/v7x for this footprint
_SMALL_INPUT_ELEMS = 128 * 1024            # below this, plain fused XLA wins


def _linreg_kernel(wb_ref, x_ref, o_ref):
    # y = w * x + b  (scalar weight/bias broadcast over the whole tile)
    w = wb_ref[0, 0]
    b = wb_ref[0, 1]
    o_ref[...] = (x_ref[...] * w + b).astype(o_ref.dtype)


def _num_tensorcores() -> int:
    """Best-effort TensorCore count (v7x: 2/chip); defaults to 1 (v5e/v6e)."""
    try:
        info = pltpu.get_tpu_info()
        for attr in ("num_cores", "num_tensorcores", "tensorcore_count", "cores_per_chip"):
            v = getattr(info, attr, None)
            if isinstance(v, int) and v > 0:
                return v
    except Exception:
        pass
    try:
        v = getattr(jax.devices()[0], "num_cores", None)
        if isinstance(v, int) and v > 0:
            return v
    except Exception:
        pass
    return 1


def linear_regression_forward(x: jax.Array, weight: jax.Array, bias: jax.Array,
                              *, force_pallas: bool = False) -> jax.Array:
    """y = weight * x + bias with scalar weight/bias (PyTorch LinearRegressionModel)."""
    orig_shape = x.shape
    dtype = x.dtype
    n = int(x.size)

    w = weight.reshape(()).astype(jnp.float32)
    b = bias.reshape(()).astype(jnp.float32)

    # Small-input bypass: launch + per-grid-step overhead dominates tiny tensors;
    # XLA fuses the scalar affine into a single pass with identical semantics.
    if n == 0 or (n < _SMALL_INPUT_ELEMS and not force_pallas):
        return (x * w + b).astype(dtype)

    itemsize = jnp.dtype(dtype).itemsize
    sub = max(8, 32 // itemsize)   # sublane multiple for this dtype's packing

    # Adaptive lane width: largest candidate dividing n -> zero-copy (no pad, no slice).
    # Any multiple of 128 keeps unmasked, lane-dense stores; DMA rows stay contiguous.
    lane = next((c for c in _LANE_CANDIDATES if n % c == 0), 128)

    rows = pl.cdiv(n, lane)
    n_padded = rows * lane

    # Block rows targeting ~4 MiB per block, sublane-aligned.
    tr = max(sub, (_TARGET_BLOCK_BYTES // (lane * itemsize)) // sub * sub)

    # Megacore (v7x only): guarantee >=2 blocks per TensorCore so each core keeps
    # intra-core double-buffering after the split. Single-TC chips don't split.
    n_tc = _num_tensorcores()
    if n_tc > 1:
        min_blocks = 2 * n_tc
        if rows > min_blocks * sub and pl.cdiv(rows, tr) < min_blocks:
            tr = max(sub, (rows // min_blocks) // sub * sub)

    if tr >= rows:
        tr = rows   # single whole-array block (always layout-legal)
    # else: tr % 8 == 0 and lane % 128 == 0 satisfy the (8,128) block rule; the
    # ragged trailing block (rows % tr) is handled by Pallas with masked stores,
    # so rows are NOT rounded up to a multiple of tr (no wasted zero traffic).

    grid = (pl.cdiv(rows, tr),)

    flat = x.reshape(-1)
    if n_padded != n:
        # Truly ragged n: pad only the < lane leftover elements (one partial row).
        flat = jnp.pad(flat, (0, n_padded - n))
    x2 = flat.reshape(rows, lane)

    # Scalars ride in a tiny SMEM window. (Scalar-prefetch would be marginally more
    # idiomatic but is a micro-win only -- the kernel is DMA-bound -- and this form
    # is proven to compile cleanly.)
    wb = jnp.stack([w, b]).reshape(1, 2)

    y2 = pl.pallas_call(
        _linreg_kernel,
        out_shape=jax.ShapeDtypeStruct((rows, lane), dtype),
        grid_spec=pltpu.PrefetchScalarGridSpec(
            num_scalar_prefetch=0,
            grid=grid,
            in_specs=[
                pl.BlockSpec((1, 2), lambda i: (0, 0), memory_space=pltpu.SMEM),
                pl.BlockSpec((tr, lane), lambda i: (i, 0)),
            ],
            out_specs=pl.BlockSpec((tr, lane), lambda i: (i, 0)),
        ),
        compiler_params=pltpu.CompilerParams(
            dimension_semantics=("parallel",),
            vmem_limit_bytes=_VMEM_LIMIT_BYTES,
        ),
    )(wb, x2)

    if n_padded != n:
        return y2.reshape(-1)[:n].reshape(orig_shape)
    return y2.reshape(orig_shape)   # zero-copy path: no slice, no extra HBM pass


if __name__ == "__main__":
    key = jax.random.PRNGKey(0)
    kx, kw, kb, kbig = jax.random.split(key, 4)

    # Deterministic parameters (torch.randn(1) analogue).
    weight = jax.random.normal(kw, (1,), dtype=jnp.float32)
    bias = jax.random.normal(kb, (1,), dtype=jnp.float32)

    # Small demo input consistent with the module (elementwise op accepts any shape).
    x = jax.random.normal(kx, (2, 4, 16, 16), dtype=jnp.float32)
    y_ref = weight[0] * x + bias[0]

    # 1) Pallas kernel on the small input (zero-copy, single whole-array block).
    y = jax.block_until_ready(linear_regression_forward(x, weight, bias, force_pallas=True))
    assert y.shape == x.shape and y.dtype == x.dtype
    assert jnp.allclose(y, y_ref, atol=1e-6, rtol=1e-6)

    # 2) Default path on the small input (plain-JAX bypass; identical semantics).
    y_fast = jax.block_until_ready(linear_regression_forward(x, weight, bias))
    assert jnp.allclose(y_fast, y_ref, atol=1e-6, rtol=1e-6)

    # 3) Larger input: multi-block grid, zero-copy (no pad / no slice) kernel path.
    x_big = jax.random.normal(kbig, (2048, 2048), dtype=jnp.float32)
    y_big = jax.block_until_ready(linear_regression_forward(x_big, weight, bias))
    assert jnp.allclose(y_big, weight[0] * x_big + bias[0], atol=1e-6, rtol=1e-6)

    # 4) Ragged size: exercises the pad-tail + masked trailing block path.
    x_rag = jax.random.normal(kx, (3, 5, 7), dtype=jnp.float32)
    y_rag = jax.block_until_ready(
        linear_regression_forward(x_rag, weight, bias, force_pallas=True))
    assert jnp.allclose(y_rag, weight[0] * x_rag + bias[0], atol=1e-6, rtol=1e-6)

    print("KERNEL_OK")
</pallas_src>

<mosaic_0001>
module attributes {stable_mosaic.version = 11 : i64} {
  func.func @_linreg_kernel(%arg0: i32, %arg1: memref<1x2xf32, #tpu.memory_space<smem>>, %arg2: memref<2x1024xf32, #tpu.memory_space<vmem>>, %arg3: memref<2x1024xf32, #tpu.memory_space<vmem>>) attributes {dimension_semantics = [#tpu.dimension_semantics<parallel>], iteration_bounds = array<i64: 1>, scalar_prefetch = 0 : i64, scratch_operands = 0 : i64, tpu.core_type = #tpu.core_type<tc>, window_params = [{transform_indices = @transform_0, window_bounds = array<i64: 1, 2>}, {transform_indices = @transform_1, window_bounds = array<i64: 2, 1024>}, {transform_indices = @transform_2, window_bounds = array<i64: 2, 1024>}]} {
    %c0 = arith.constant 0 : index
    %c0_0 = arith.constant 0 : index
    %0 = memref.load %arg1[%c0, %c0_0] : memref<1x2xf32, #tpu.memory_space<smem>>
    %c0_1 = arith.constant 0 : index
    %c1 = arith.constant 1 : index
    %1 = memref.load %arg1[%c0_1, %c1] : memref<1x2xf32, #tpu.memory_space<smem>>
    %c0_2 = arith.constant 0 : index
    %c0_3 = arith.constant 0 : index
    %2 = vector.load %arg2[%c0_2, %c0_3] : memref<2x1024xf32, #tpu.memory_space<vmem>>, vector<2x1024xf32>
    %3 = vector.broadcast %0 : f32 to vector<2x1024xf32>
    %4 = arith.mulf %2, %3 : vector<2x1024xf32>
    %5 = vector.broadcast %1 : f32 to vector<2x1024xf32>
    %6 = arith.addf %4, %5 : vector<2x1024xf32>
    %c0_4 = arith.constant 0 : index
    %c0_5 = arith.constant 0 : index
    %7 = vector.load %arg3[%c0_4, %c0_5] : memref<2x1024xf32, #tpu.memory_space<vmem>>, vector<2x1024xf32>
    tpu.vector_store %arg3[%c0_4, %c0_5], %6 {strides = array<i32>} : memref<2x1024xf32, #tpu.memory_space<vmem>>, vector<2x1024xf32>,
    return
  }
  func.func @transform_0(%arg0: i32) -> (i32, i32) {
    %c0_i32 = arith.constant 0 : i32
    %c0_i32_0 = arith.constant 0 : i32
    %c0_i32_1 = arith.constant 0 : i32
    return %c0_i32, %c0_i32_0 : i32, i32
  }
  func.func @transform_1(%arg0: i32) -> (i32, i32) {
    %c0_i32 = arith.constant 0 : i32
    %c0_i32_0 = arith.constant 0 : i32
    return %arg0, %c0_i32 : i32, i32
  }
  func.func @transform_2(%arg0: i32) -> (i32, i32) {
    %c0_i32 = arith.constant 0 : i32
    %c0_i32_0 = arith.constant 0 : i32
    return %arg0, %c0_i32 : i32, i32
  }
}

</mosaic_0001>

<llo_original>
// kernel: tpu_custom_call.1
$region0: #{tpu_custom_call.1}
  #allocation0 [shape = 'u32[]', space=smem, size = 0x4, offset = 0x4, fixed_abs, tag = 'smem constant byte address 0x4 - core index']
  #allocation1 [shape = 'u32[144,128]{1,0:T(1,128)}', space=vmem, size = 0x12000, scoped, tag = 'internal scratch']
  %s0 = inlined_call_operand.hbm [shape: f32[1,2], index: 0, kind: input, shape index: {}]
  %s1 = inlined_call_operand.hbm [shape: f32[2,1024], index: 1, kind: input, shape index: {}]
  %s2 = inlined_call_operand.hbm [shape: f32[2,1024], index: 2, kind: output, shape index: {}]
  %s3 = sld [smem:[#allocation0]]
  $region26: #{tpu_custom_call.1} parent=0
    _
  %s5 = ssub.s32 1, %s3
  %s6 = scalar_select 0, %s5, %s3
  $region1: #{tpu_custom_call.1} parent=0
    #allocation2 [shape = 'u8[512]{0}', space=smem, size = 0x200, scoped, tag = 'input window, operand 0, single buffered']
    #allocation3 [shape = 's32[1]{0}', space=sflag, size = 0x4, scoped, tag = 'scoped memory for tpu_custom_call.1']
    #allocation4 [shape = 's32[1]{0}', space=sflag, size = 0x4, scoped, tag = 'scoped memory for tpu_custom_call.1']
    #allocation5 [shape = 's32[1]{0}', space=sflag, size = 0x4, scoped, tag = 'scoped memory for tpu_custom_call.1']
    #allocation6 [shape = 'u8[8192]{0}', space=vmem, size = 0x2000, scoped, tag = 'input window, operand 1, single buffered']
    #allocation7 [shape = 'u8[8192]{0}', space=vmem, size = 0x2000, scoped, tag = 'output window, operand 0, single buffered']
    %7 = vsyncpa [#allocation5], 0
    %8 = vsyncpa [#allocation3], 0
    %9 = vsyncpa [#allocation4], 0
    // Predicated region
    $region2: #{tpu_custom_call.1} parent=1 // pred_check
      _
    $region3: #{tpu_custom_call.1} parent=1 // pred_check_branch
      %11 = sbr.rel (0) target = $region5
    $region4: #{tpu_custom_call.1} parent=1 // pred_region
      %s13 = ssub.s32 16, 16
      %14 = vsyncadd [#allocation5], %s13
      %17 = dma.hbm_to_smem %s0, 16, [#allocation2], [#allocation5]
    $region5: #{tpu_custom_call.1} parent=1 // pred_fallthru
      _
    // Predicated region
    $region6: #{tpu_custom_call.1} parent=1 // pred_check
      _
    $region7: #{tpu_custom_call.1} parent=1 // pred_check_branch
      %19 = sbr.rel (0) target = $region9
    $region8: #{tpu_custom_call.1} parent=1 // pred_region
      %s21 = ssub.s32 256, 256
      %22 = vsyncadd [#allocation3], %s21
      %s24 = sshll.u32 [#allocation6], 4
      %s25 = int_to_ptr.vmem [resolvable:$true] %s24
      %27 = dma.hbm_to_vmem [thread:$0]  %s1, 256, %s25, [#allocation3]
    $region9: #{tpu_custom_call.1} parent=1 // pred_fallthru
      _
    // Predicated region
    $region10: #{tpu_custom_call.1} parent=1 // pred_check
      _
    $region11: #{tpu_custom_call.1} parent=1 // pred_check_branch
      %29 = sbr.rel (0) target = $region13
    $region12: #{tpu_custom_call.1} parent=1 // pred_region
      %30 = dma.done [#allocation5], 16
    $region13: #{tpu_custom_call.1} parent=1 // pred_fallthru
      _
    // Predicated region
    $region14: #{tpu_custom_call.1} parent=1 // pred_check
      _
    $region15: #{tpu_custom_call.1} parent=1 // pred_check_branch
      %32 = sbr.rel (0) target = $region17
    $region16: #{tpu_custom_call.1} parent=1 // pred_region
      %33 = dma.done [#allocation3], 256
    $region17: #{tpu_custom_call.1} parent=1 // pred_fallthru
      _
    %34 = sfence
    %s35 = sld [smem:[#allocation2]]
    %s36 = sld [smem:[#allocation2 + $0x1]]
    %v37 = vld [vmem:[#allocation6] sm:$0xff]
    %v38 = vld [vmem:[#allocation6 + $0x8] sm:$0xff]
    %v39 = vstv %s35
    %v40 = vmul.f32 %v37, %v39
    %v41 = vmul.f32 %v38, %v39
    %v42 = vstv %s36
    %v43 = vadd.f32 %v40, %v42
    %v44 = vadd.f32 %v41, %v42
    %45 = vst [vmem:[#allocation7] sm:$0xff] %v43
    %46 = vst [vmem:[#allocation7 + $0x8] sm:$0xff] %v44
    // Predicated region
    $region18: #{tpu_custom_call.1} parent=1 // pred_check
      _
    $region19: #{tpu_custom_call.1} parent=1 // pred_check_branch
      %48 = sbr.rel (0) target = $region21
    $region20: #{tpu_custom_call.1} parent=1 // pred_region
      %s50 = ssub.s32 256, 256
      %51 = vsyncadd [#allocation4], %s50
      %s53 = sshll.u32 [#allocation7], 4
      %s54 = int_to_ptr.vmem [resolvable:$true] %s53
      %56 = dma.vmem_to_hbm [thread:$0]  %s54, 256, %s2, [#allocation4]
    $region21: #{tpu_custom_call.1} parent=1 // pred_fallthru
      _
    // Predicated region
    $region22: #{tpu_custom_call.1} parent=1 // pred_check
      _
    $region23: #{tpu_custom_call.1} parent=1 // pred_check_branch
      %58 = sbr.rel (0) target = $region25
    $region24: #{tpu_custom_call.1} parent=1 // pred_region
      %59 = dma.done [#allocation4], 256
    $region25: #{tpu_custom_call.1} parent=1 // pred_fallthru
      _
    %60 = vsyncpa [#allocation3], 1
    %61 = vsyncpa [#allocation4], 1
    %62 = vsyncpa [#allocation5], 1

</llo_original>
